<compile_context>
chip_gen: v6e
topology: v6e:2x2x1
jax: 0.10.0
libtpu: 0.0.40
codegen_flags: <defaults>
</compile_context>

<pallas_src>
import jax
import jax.numpy as jnp
from jax.experimental import pallas as pl
from jax.experimental.pallas import tpu as pltpu


def _fused_permute_products_kernel(x1_ref, x2_ref, o_ref):
    # x1_ref, x2_ref: (D0, T1) input column-tiles in VMEM (D2==1 squeezed).
    # o_ref: (T1, 3*D0) packed output rows: [x11 | x12 | x13] along the lane axis.
    a = x1_ref[...].astype(jnp.float32)   # f32 math (v5e VPU has no bf16 path)
    b = x2_ref[...].astype(jnp.float32)
    # Fused permute(1,0,2) with the unit dim squeezed: minor-dims transpose (XLU).
    a_t = jnp.transpose(a, (1, 0))         # x11 tile
    ab_t = jnp.transpose(a * b, (1, 0))    # x12 tile
    bb_t = jnp.transpose(b * b, (1, 0))    # x13 tile
    # Single lane-dense packed store.
    o_ref[...] = jnp.concatenate([a_t, ab_t, bb_t], axis=-1).astype(o_ref.dtype)


def _pick_row_tile(D0, D1, itemsize):
    """Largest 128-multiple tile of the output-row axis (D1) that keeps the
    double-buffered blocks within a VMEM budget sized for v7x (64 MiB physical)."""
    if D1 <= 128 or D1 % 128 != 0:
        return D1  # full-extent block: always legal (covers the tiny spec shape)
    # Per grid step (double-buffered): 2 x [2 inputs (D0,T1) + 1 output (T1,3*D0)]
    budget = 32 * 1024 * 1024
    max_t = budget // (10 * max(D0, 1) * itemsize)
    t = max(128, (max_t // 128) * 128)
    t = min(t, 1024, D1)  # 512-1024 lanes ~ measured HBM-roofline sweet spot
    while D1 % t != 0:    # keep tiles dividing D1 (no partial edge blocks)
        t -= 128
    return t


def model_forward(x1, x2):
    """Mirrors Model.forward: returns (x11, x12, x13)."""
    assert x1.shape == x2.shape and x1.dtype == x2.dtype
    D0, D1, D2 = x1.shape
    # Spec shape is (2, 2, 1); the fused-transpose path relies on D2 == 1.
    # TODO(synk): generalize the fused in-kernel permute to D2 > 1 if needed.
    assert D2 == 1

    # Squeeze the trailing unit dim so the kernel works on plain 2-D blocks.
    a2 = x1.reshape(D0, D1)
    b2 = x2.reshape(D0, D1)

    t1 = _pick_row_tile(D0, D1, jnp.dtype(x1.dtype).itemsize)
    grid = (pl.cdiv(D1, t1),)

    out = pl.pallas_call(
        _fused_permute_products_kernel,
        out_shape=jax.ShapeDtypeStruct((D1, 3 * D0), x1.dtype),
        grid_spec=pltpu.PrefetchScalarGridSpec(
            num_scalar_prefetch=0,
            grid=grid,
            in_specs=[
                pl.BlockSpec((D0, t1), lambda i: (0, i)),
                pl.BlockSpec((D0, t1), lambda i: (0, i)),
            ],
            out_specs=pl.BlockSpec((t1, 3 * D0), lambda i: (i, 0)),
        ),
        compiler_params=pltpu.CompilerParams(
            dimension_semantics=("parallel",),
            vmem_limit_bytes=48 * 1024 * 1024,
        ),
    )(a2, b2)

    # Cheap lane-axis slices; reshape back to the permuted 3-D shape (D1, D0, D2).
    x11 = out[:, :D0].reshape(D1, D0, D2)
    x12 = out[:, D0:2 * D0].reshape(D1, D0, D2)
    x13 = out[:, 2 * D0:].reshape(D1, D0, D2)
    return x11, x12, x13


if __name__ == "__main__":
    key = jax.random.PRNGKey(0)
    k1, k2 = jax.random.split(key)
    # Shapes match the module's example inputs: (2, 2, 1)
    x1 = jax.random.normal(k1, (2, 2, 1), dtype=jnp.float32)
    x2 = jax.random.normal(k2, (2, 2, 1), dtype=jnp.float32)

    fwd = jax.jit(model_forward)
    x11, x12, x13 = fwd(x1, x2)
    jax.block_until_ready((x11, x12, x13))

    # Pure-JAX reference check.
    r11 = jnp.transpose(x1, (1, 0, 2))
    r12 = jnp.transpose(x1 * x2, (1, 0, 2))
    r13 = jnp.transpose(x2 * x2, (1, 0, 2))
    assert x11.shape == (2, 2, 1) and x12.shape == (2, 2, 1) and x13.shape == (2, 2, 1)
    assert jnp.allclose(x11, r11) and jnp.allclose(x12, r12) and jnp.allclose(x13, r13)

    print("KERNEL_OK")
</pallas_src>

<mosaic_0001>
module attributes {stable_mosaic.version = 11 : i64} {
  func.func @_fused_permute_products_kernel(%arg0: i32, %arg1: memref<2x2xf32, #tpu.memory_space<vmem>>, %arg2: memref<2x2xf32, #tpu.memory_space<vmem>>, %arg3: memref<2x6xf32, #tpu.memory_space<vmem>>) attributes {dimension_semantics = [#tpu.dimension_semantics<parallel>], iteration_bounds = array<i64: 1>, scalar_prefetch = 0 : i64, scratch_operands = 0 : i64, tpu.core_type = #tpu.core_type<tc>, window_params = [{transform_indices = @transform_0, window_bounds = array<i64: 2, 2>}, {transform_indices = @transform_1, window_bounds = array<i64: 2, 2>}, {transform_indices = @transform_2, window_bounds = array<i64: 2, 6>}]} {
    %c0 = arith.constant 0 : index
    %c0_0 = arith.constant 0 : index
    %0 = vector.load %arg1[%c0, %c0_0] : memref<2x2xf32, #tpu.memory_space<vmem>>, vector<2x2xf32>
    %c0_1 = arith.constant 0 : index
    %c0_2 = arith.constant 0 : index
    %1 = vector.load %arg2[%c0_1, %c0_2] : memref<2x2xf32, #tpu.memory_space<vmem>>, vector<2x2xf32>
    %2 = tpu.transpose %0, [1, 0] : vector<2x2xf32> -> vector<2x2xf32>
    %3 = arith.mulf %0, %1 : vector<2x2xf32>
    %4 = tpu.transpose %3, [1, 0] : vector<2x2xf32> -> vector<2x2xf32>
    %5 = arith.mulf %1, %1 : vector<2x2xf32>
    %6 = tpu.transpose %5, [1, 0] : vector<2x2xf32> -> vector<2x2xf32>
    %7 = tpu.concatenate %2, %4, %6 in 1 : vector<2x2xf32>, vector<2x2xf32>, vector<2x2xf32> -> vector<2x6xf32>
    %c0_3 = arith.constant 0 : index
    %c0_4 = arith.constant 0 : index
    %8 = vector.load %arg3[%c0_3, %c0_4] : memref<2x6xf32, #tpu.memory_space<vmem>>, vector<2x6xf32>
    tpu.vector_store %arg3[%c0_3, %c0_4], %7 {strides = array<i32>} : memref<2x6xf32, #tpu.memory_space<vmem>>, vector<2x6xf32>,
    return
  }
  func.func @transform_0(%arg0: i32) -> (i32, i32) {
    %c0_i32 = arith.constant 0 : i32
    %c0_i32_0 = arith.constant 0 : i32
    return %c0_i32, %arg0 : i32, i32
  }
  func.func @transform_1(%arg0: i32) -> (i32, i32) {
    %c0_i32 = arith.constant 0 : i32
    %c0_i32_0 = arith.constant 0 : i32
    return %c0_i32, %arg0 : i32, i32
  }
  func.func @transform_2(%arg0: i32) -> (i32, i32) {
    %c0_i32 = arith.constant 0 : i32
    %c0_i32_0 = arith.constant 0 : i32
    return %arg0, %c0_i32 : i32, i32
  }
}

</mosaic_0001>

<llo_original>
// kernel: model_forward.1
$region0: #{model_forward.1}
  #allocation0 [shape = 'u32[]', space=smem, size = 0x4, offset = 0x4, fixed_abs, tag = 'smem constant byte address 0x4 - core index']
  #allocation1 [shape = 'u32[144,128]{1,0:T(1,128)}', space=vmem, size = 0x12000, scoped, tag = 'internal scratch']
  %s0 = inlined_call_operand.vmem [shape: f32[2,2], index: 0, kind: input, shape index: {}]
  %s1 = inlined_call_operand.vmem [shape: f32[2,2], index: 1, kind: input, shape index: {}]
  %s2 = inlined_call_operand.vmem [shape: f32[2,6], index: 2, kind: output, shape index: {}]
  %s3 = sld [smem:[#allocation0]]
  $region18: #{model_forward.1} parent=0
    _
  %s5 = ssub.s32 1, %s3
  %s6 = scalar_select 0, %s5, %s3
  // Predicated region
  $region2: #{model_forward.1} parent=0 // pred_check
    _
  $region3: #{model_forward.1} parent=0 // pred_check_branch
    %8 = sbr.rel (0) target = $region5
  $region4: #{model_forward.1} parent=0 // pred_region
    _
  $region5: #{model_forward.1} parent=0 // pred_fallthru
    _
  // Predicated region
  $region6: #{model_forward.1} parent=0 // pred_check
    _
  $region7: #{model_forward.1} parent=0 // pred_check_branch
    %10 = sbr.rel (0) target = $region9
  $region8: #{model_forward.1} parent=0 // pred_region
    _
  $region9: #{model_forward.1} parent=0 // pred_fallthru
    _
  %v11 = vld [vmem:[%s0] sm:$0x3]
  %v12 = vld [vmem:[%s1] sm:$0x3]
  %13 = vxpose.xlu0.b32.start [1/16] %v11, 128
  %14 = vxpose.xlu0.b32.cont [2/16] 0.0, 128
  %15 = vxpose.xlu0.b32.cont [3/16] 0.0, 128
  %16 = vxpose.xlu0.b32.cont [4/16] 0.0, 128
  %17 = vxpose.xlu0.b32.cont [5/16] 0.0, 128
  %18 = vxpose.xlu0.b32.cont [6/16] 0.0, 128
  %19 = vxpose.xlu0.b32.cont [7/16] 0.0, 128
  %20 = vxpose.xlu0.b32.cont [8/16] 0.0, 128
  %21 = vxpose.xlu0.b32.cont [9/16] 0.0, 128
  %22 = vxpose.xlu0.b32.cont [10/16] 0.0, 128
  %23 = vxpose.xlu0.b32.cont [11/16] 0.0, 128
  %24 = vxpose.xlu0.b32.cont [12/16] 0.0, 128
  %25 = vxpose.xlu0.b32.cont [13/16] 0.0, 128
  %26 = vxpose.xlu0.b32.cont [14/16] 0.0, 128
  %27 = vxpose.xlu0.b32.cont [15/16] 0.0, 128
  %28 = vxpose.xlu0.b32.end [16/16] 0.0, 128
  %v29 = vpop.trf.xlu0
  %v30 = vpop.trf.xlu0
  %v31 = vpop.trf.xlu0
  %v32 = vpop.trf.xlu0
  %v33 = vpop.trf.xlu0
  %v34 = vpop.trf.xlu0
  %v35 = vpop.trf.xlu0
  %v36 = vpop.trf.xlu0
  %v37 = vpop.trf.xlu0
  %v38 = vpop.trf.xlu0
  %v39 = vpop.trf.xlu0
  %v40 = vpop.trf.xlu0
  %v41 = vpop.trf.xlu0
  %v42 = vpop.trf.xlu0
  %v43 = vpop.trf.xlu0
  %v44 = vpop.trf.xlu0
  %v45 = vmul.f32 %v11, %v12
  %46 = vxpose.xlu0.b32.start [1/16] %v45, 128
  %47 = vxpose.xlu0.b32.cont [2/16] 0.0, 128
  %48 = vxpose.xlu0.b32.cont [3/16] 0.0, 128
  %49 = vxpose.xlu0.b32.cont [4/16] 0.0, 128
  %50 = vxpose.xlu0.b32.cont [5/16] 0.0, 128
  %51 = vxpose.xlu0.b32.cont [6/16] 0.0, 128
  %52 = vxpose.xlu0.b32.cont [7/16] 0.0, 128
  %53 = vxpose.xlu0.b32.cont [8/16] 0.0, 128
  %54 = vxpose.xlu0.b32.cont [9/16] 0.0, 128
  %55 = vxpose.xlu0.b32.cont [10/16] 0.0, 128
  %56 = vxpose.xlu0.b32.cont [11/16] 0.0, 128
  %57 = vxpose.xlu0.b32.cont [12/16] 0.0, 128
  %58 = vxpose.xlu0.b32.cont [13/16] 0.0, 128
  %59 = vxpose.xlu0.b32.cont [14/16] 0.0, 128
  %60 = vxpose.xlu0.b32.cont [15/16] 0.0, 128
  %61 = vxpose.xlu0.b32.end [16/16] 0.0, 128
  %v62 = vpop.trf.xlu0
  %v63 = vpop.trf.xlu0
  %v64 = vpop.trf.xlu0
  %v65 = vpop.trf.xlu0
  %v66 = vpop.trf.xlu0
  %v67 = vpop.trf.xlu0
  %v68 = vpop.trf.xlu0
  %v69 = vpop.trf.xlu0
  %v70 = vpop.trf.xlu0
  %v71 = vpop.trf.xlu0
  %v72 = vpop.trf.xlu0
  %v73 = vpop.trf.xlu0
  %v74 = vpop.trf.xlu0
  %v75 = vpop.trf.xlu0
  %v76 = vpop.trf.xlu0
  %v77 = vpop.trf.xlu0
  %v78 = vmul.f32 %v12, %v12
  %79 = vxpose.xlu0.b32.start [1/16] %v78, 128
  %80 = vxpose.xlu0.b32.cont [2/16] 0.0, 128
  %81 = vxpose.xlu0.b32.cont [3/16] 0.0, 128
  %82 = vxpose.xlu0.b32.cont [4/16] 0.0, 128
  %83 = vxpose.xlu0.b32.cont [5/16] 0.0, 128
  %84 = vxpose.xlu0.b32.cont [6/16] 0.0, 128
  %85 = vxpose.xlu0.b32.cont [7/16] 0.0, 128
  %86 = vxpose.xlu0.b32.cont [8/16] 0.0, 128
  %87 = vxpose.xlu0.b32.cont [9/16] 0.0, 128
  %88 = vxpose.xlu0.b32.cont [10/16] 0.0, 128
  %89 = vxpose.xlu0.b32.cont [11/16] 0.0, 128
  %90 = vxpose.xlu0.b32.cont [12/16] 0.0, 128
  %91 = vxpose.xlu0.b32.cont [13/16] 0.0, 128
  %92 = vxpose.xlu0.b32.cont [14/16] 0.0, 128
  %93 = vxpose.xlu0.b32.cont [15/16] 0.0, 128
  %94 = vxpose.xlu0.b32.end [16/16] 0.0, 128
  %v95 = vpop.trf.xlu0
  %v96 = vpop.trf.xlu0
  %v97 = vpop.trf.xlu0
  %v98 = vpop.trf.xlu0
  %v99 = vpop.trf.xlu0
  %v100 = vpop.trf.xlu0
  %v101 = vpop.trf.xlu0
  %v102 = vpop.trf.xlu0
  %v103 = vpop.trf.xlu0
  %v104 = vpop.trf.xlu0
  %v105 = vpop.trf.xlu0
  %v106 = vpop.trf.xlu0
  %v107 = vpop.trf.xlu0
  %v108 = vpop.trf.xlu0
  %v109 = vpop.trf.xlu0
  %v110 = vpop.trf.xlu0
  %112 = vrot.lane.b32.xlu0 %v62, 2
  %v113 = vpop.permute.xlu0 %112
  %116 = vrot.lane.b32.xlu0 %v95, 4
  %v117 = vpop.permute.xlu0 %116
  %vm119 = vcmask 15360
  %v120 = vsel %vm119, %v29, %v113
  %vm121 = vcmask 31744
  %v122 = vsel %vm121, %v120, %v117
  %vm123 = vcmask 41984
  %124 = vst.msk [vmem:[%s2] sm:$0x3] %vm123, %v122
  // Predicated region
  $region10: #{model_forward.1} parent=0 // pred_check
    _
  $region11: #{model_forward.1} parent=0 // pred_check_branch
    %126 = sbr.rel (0) target = $region13
  $region12: #{model_forward.1} parent=0 // pred_region
    _
  $region13: #{model_forward.1} parent=0 // pred_fallthru
    _
  // Predicated region
  $region14: #{model_forward.1} parent=0 // pred_check
    _
  $region15: #{model_forward.1} parent=0 // pred_check_branch
    %128 = sbr.rel (0) target = $region17
  $region16: #{model_forward.1} parent=0 // pred_region
    _
  $region17: #{model_forward.1} parent=0 // pred_fallthru
    _

</llo_original>
